<compile_context>
chip_gen: v5e
topology: v5e:2x2
jax: 0.10.0
libtpu: 0.0.40
codegen_flags: <defaults>
</compile_context>

<pallas_src>
import functools

import jax
import jax.numpy as jnp
from jax.experimental import pallas as pl
from jax.experimental.pallas import tpu as pltpu

JOINT_POS_LEN = 12  # TODO(synk): JOINT_POS_LEN is not defined in the reference source.

IN_DIM = 15
H1_DIM = 30
H2_DIM = 45
OUT_DIM = JOINT_POS_LEN
OUT_PAD = 128          # lane-dense padded width for the in-kernel fc3 matmul only

DEFAULT_TILE_B = 4096  # large batch tile (v5e/v6e roofline); v7x still gets >=2
                       # grid steps via the cdiv(B, 2) clamp below.


def _round_up(n, m):
    return ((n + m - 1) // m) * m


def sensornet_kernel(x_ref, w1_ref, b1_ref, w2_ref, b2_ref, w3_ref, b3_ref, o_ref):
    # Matmul operands in the weight dtype (bf16 by default, f32 optional);
    # accumulate in f32 on the MXU; bias-add / ReLU stay in f32 (VPU, v5e-safe).
    w_dtype = w1_ref.dtype

    x = x_ref[...].astype(w_dtype)                                     # (TB, 15)

    # fc1 + ReLU
    h1 = jnp.dot(x, w1_ref[...], preferred_element_type=jnp.float32)   # (TB, 30)
    h1 = jnp.maximum(h1 + b1_ref[...], 0.0)

    # fc2 + ReLU
    h2 = jnp.dot(h1.astype(w_dtype), w2_ref[...],
                 preferred_element_type=jnp.float32)                   # (TB, 45)
    h2 = jnp.maximum(h2 + b2_ref[...], 0.0)

    # fc3: lane-dense matmul against 128-padded w3, then bias/store only the
    # real OUT_DIM lanes (narrow output block -> minimal HBM write traffic).
    out = jnp.dot(h2.astype(w_dtype), w3_ref[...],
                  preferred_element_type=jnp.float32)                  # (TB, 128)
    out = out[:, :OUT_DIM] + b3_ref[...]                               # (TB, 12)

    o_ref[...] = out.astype(o_ref.dtype)


def prepare_params(params, compute_dtype=jnp.bfloat16):
    """One-time (hoisted) prep: pad fc3 weight to 128 lanes, cast weights to the
    matmul compute dtype. Biases stay f32 (f32 bias-add / ReLU in-kernel)."""
    w1, b1, w2, b2, w3, b3 = params
    w3p = jnp.zeros((H2_DIM, OUT_PAD), w3.dtype).at[:, :OUT_DIM].set(w3)
    return (w1.astype(compute_dtype), b1.astype(jnp.float32),
            w2.astype(compute_dtype), b2.astype(jnp.float32),
            w3p.astype(compute_dtype), b3.astype(jnp.float32))


@functools.partial(jax.jit, static_argnames=("tile_b",))
def sensornet_forward(x, prepared, *, tile_b=DEFAULT_TILE_B):
    """x: (B, 15), f32 or bf16 (bf16 halves input HBM read).
    prepared: output of prepare_params. Returns (B, JOINT_POS_LEN) f32."""
    w1, b1, w2, b2, w3p, b3 = prepared
    B = x.shape[0]

    # Batch tile: multiple of 8 sublanes, and at most ceil(B/2) rounded up so the
    # grid has >= 2 steps whenever possible (v7x: 2 TensorCores share the
    # "parallel" axis). On v5e/v6e the extra step costs ~0.35 us, negligible.
    tb = max(8, min(tile_b, _round_up(-(-B // 2), 8)))
    grid = (pl.cdiv(B, tb),)

    batch_spec = lambda feat: pl.BlockSpec((tb, feat), lambda i: (i, 0))
    const_spec = lambda shape: pl.BlockSpec(shape, lambda i: (0, 0))

    return pl.pallas_call(
        sensornet_kernel,
        out_shape=jax.ShapeDtypeStruct((B, OUT_DIM), jnp.float32),
        grid_spec=pltpu.PrefetchScalarGridSpec(
            num_scalar_prefetch=0,
            grid=grid,
            in_specs=[
                batch_spec(IN_DIM),                 # x       (tb, 15)
                const_spec((IN_DIM, H1_DIM)),       # w1      (15, 30)
                const_spec((1, H1_DIM)),            # b1      (1, 30)
                const_spec((H1_DIM, H2_DIM)),       # w2      (30, 45)
                const_spec((1, H2_DIM)),            # b2      (1, 45)
                const_spec((H2_DIM, OUT_PAD)),      # w3 pad  (45, 128)
                const_spec((1, OUT_DIM)),           # b3      (1, 12)
            ],
            out_specs=batch_spec(OUT_DIM),          # out     (tb, 12)
        ),
        compiler_params=pltpu.CompilerParams(
            dimension_semantics=("parallel",),
            vmem_limit_bytes=32 * 1024 * 1024,
        ),
    )(x, w1, b1, w2, b2, w3p, b3)


def init_params(key):
    # PyTorch-Linear-style uniform init; weights stored as (in, out) so the
    # kernel computes x @ W directly.
    ks = jax.random.split(key, 6)

    def linear(kw, kb, fan_in, fan_out):
        bound = 1.0 / jnp.sqrt(fan_in)
        w = jax.random.uniform(kw, (fan_in, fan_out), jnp.float32, -bound, bound)
        b = jax.random.uniform(kb, (1, fan_out), jnp.float32, -bound, bound)
        return w, b

    w1, b1 = linear(ks[0], ks[1], IN_DIM, H1_DIM)
    w2, b2 = linear(ks[2], ks[3], H1_DIM, H2_DIM)
    w3, b3 = linear(ks[4], ks[5], H2_DIM, OUT_DIM)
    return (w1, b1, w2, b2, w3, b3)


def reference_forward(x, params):
    w1, b1, w2, b2, w3, b3 = params
    h1 = jnp.maximum(x @ w1 + b1, 0.0)
    h2 = jnp.maximum(h1 @ w2 + b2, 0.0)
    return h2 @ w3 + b3


if __name__ == "__main__":
    key = jax.random.PRNGKey(0)
    k_x, k_x2, k_p = jax.random.split(key, 3)
    params = init_params(k_p)

    prepared_f32 = prepare_params(params, compute_dtype=jnp.float32)
    prepared_bf16 = prepare_params(params, compute_dtype=jnp.bfloat16)  # default path

    # 1) Small batch, f32 path (single grid step, tight tolerance).
    B_small = 8
    x_small = jax.random.normal(k_x, (B_small, IN_DIM), jnp.float32)
    out_small = jax.block_until_ready(sensornet_forward(x_small, prepared_f32))
    ref_small = reference_forward(x_small, params)
    assert out_small.shape == (B_small, OUT_DIM), out_small.shape
    assert jnp.allclose(out_small, ref_small, atol=1e-5, rtol=1e-5), "f32 small-batch mismatch"

    # 2) Multi-tile batch (grid >= 2 -> both v7x TensorCores), f32 path.
    B_big = 1024
    x_big = jax.random.normal(k_x2, (B_big, IN_DIM), jnp.float32)
    out_big = jax.block_until_ready(sensornet_forward(x_big, prepared_f32))
    ref_big = reference_forward(x_big, params)
    assert out_big.shape == (B_big, OUT_DIM), out_big.shape
    assert jnp.allclose(out_big, ref_big, atol=1e-5, rtol=1e-5), "f32 multi-tile mismatch"

    # 3) Default bf16 compute path with bf16 input (halved x HBM read),
    #    f32 accumulation -> loose tolerance vs. f32 reference on the same
    #    bf16-rounded input.
    x_big_bf16 = x_big.astype(jnp.bfloat16)
    out_bf16 = jax.block_until_ready(sensornet_forward(x_big_bf16, prepared_bf16))
    ref_bf16 = reference_forward(x_big_bf16.astype(jnp.float32), params)
    assert out_bf16.shape == (B_big, OUT_DIM), out_bf16.shape
    assert out_bf16.dtype == jnp.float32
    assert jnp.allclose(out_bf16, ref_bf16, atol=5e-2, rtol=5e-2), "bf16 mismatch"

    print("KERNEL_OK")
</pallas_src>

<mosaic_0001>
module attributes {stable_mosaic.version = 11 : i64} {
  func.func @sensornet_kernel(%arg0: i32, %arg1: memref<8x15xf32, #tpu.memory_space<vmem>>, %arg2: memref<15x30xf32, #tpu.memory_space<vmem>>, %arg3: memref<1x30xf32, #tpu.memory_space<vmem>>, %arg4: memref<30x45xf32, #tpu.memory_space<vmem>>, %arg5: memref<1x45xf32, #tpu.memory_space<vmem>>, %arg6: memref<45x128xf32, #tpu.memory_space<vmem>>, %arg7: memref<1x12xf32, #tpu.memory_space<vmem>>, %arg8: memref<8x12xf32, #tpu.memory_space<vmem>>) attributes {dimension_semantics = [#tpu.dimension_semantics<parallel>], iteration_bounds = array<i64: 1>, scalar_prefetch = 0 : i64, scratch_operands = 0 : i64, tpu.core_type = #tpu.core_type<tc>, window_params = [{transform_indices = @transform_0, window_bounds = array<i64: 8, 15>}, {pipeline_mode = #tpu.pipeline_mode<synchronous>, transform_indices = @transform_1, window_bounds = array<i64: 15, 30>}, {pipeline_mode = #tpu.pipeline_mode<synchronous>, transform_indices = @transform_2, window_bounds = array<i64: 1, 30>}, {pipeline_mode = #tpu.pipeline_mode<synchronous>, transform_indices = @transform_3, window_bounds = array<i64: 30, 45>}, {pipeline_mode = #tpu.pipeline_mode<synchronous>, transform_indices = @transform_4, window_bounds = array<i64: 1, 45>}, {pipeline_mode = #tpu.pipeline_mode<synchronous>, transform_indices = @transform_5, window_bounds = array<i64: 45, 128>}, {pipeline_mode = #tpu.pipeline_mode<synchronous>, transform_indices = @transform_6, window_bounds = array<i64: 1, 12>}, {transform_indices = @transform_7, window_bounds = array<i64: 8, 12>}]} {
    %c0 = arith.constant 0 : index
    %c0_0 = arith.constant 0 : index
    %0 = vector.load %arg1[%c0, %c0_0] : memref<8x15xf32, #tpu.memory_space<vmem>>, vector<8x15xf32>
    %c0_1 = arith.constant 0 : index
    %c0_2 = arith.constant 0 : index
    %1 = vector.load %arg2[%c0_1, %c0_2] : memref<15x30xf32, #tpu.memory_space<vmem>>, vector<15x30xf32>
    %cst = arith.constant dense<0.000000e+00> : vector<8x30xf32>
    %2 = tpu.matmul %0, %1, %cst {dimension_numbers = #tpu.dot_dimension_numbers<[1], [0], [0], [1], [0, 0, 1, 1], [], []>} : vector<8x15xf32>, vector<15x30xf32>, vector<8x30xf32> -> vector<8x30xf32>
    %c0_3 = arith.constant 0 : index
    %c0_4 = arith.constant 0 : index
    %3 = vector.load %arg3[%c0_3, %c0_4] : memref<1x30xf32, #tpu.memory_space<vmem>>, vector<1x30xf32>
    %4 = vector.broadcast %3 : vector<1x30xf32> to vector<8x30xf32>
    %5 = arith.addf %2, %4 : vector<8x30xf32>
    %cst_5 = arith.constant 0.000000e+00 : f32
    %6 = vector.broadcast %cst_5 : f32 to vector<8x30xf32>
    %7 = arith.maximumf %5, %6 : vector<8x30xf32>
    %c0_6 = arith.constant 0 : index
    %c0_7 = arith.constant 0 : index
    %8 = vector.load %arg4[%c0_6, %c0_7] : memref<30x45xf32, #tpu.memory_space<vmem>>, vector<30x45xf32>
    %cst_8 = arith.constant dense<0.000000e+00> : vector<8x45xf32>
    %9 = tpu.matmul %7, %8, %cst_8 {dimension_numbers = #tpu.dot_dimension_numbers<[1], [0], [0], [1], [0, 0, 1, 1], [], []>} : vector<8x30xf32>, vector<30x45xf32>, vector<8x45xf32> -> vector<8x45xf32>
    %c0_9 = arith.constant 0 : index
    %c0_10 = arith.constant 0 : index
    %10 = vector.load %arg5[%c0_9, %c0_10] : memref<1x45xf32, #tpu.memory_space<vmem>>, vector<1x45xf32>
    %11 = vector.broadcast %10 : vector<1x45xf32> to vector<8x45xf32>
    %12 = arith.addf %9, %11 : vector<8x45xf32>
    %cst_11 = arith.constant 0.000000e+00 : f32
    %13 = vector.broadcast %cst_11 : f32 to vector<8x45xf32>
    %14 = arith.maximumf %12, %13 : vector<8x45xf32>
    %c0_12 = arith.constant 0 : index
    %c0_13 = arith.constant 0 : index
    %15 = vector.load %arg6[%c0_12, %c0_13] : memref<45x128xf32, #tpu.memory_space<vmem>>, vector<45x128xf32>
    %cst_14 = arith.constant dense<0.000000e+00> : vector<8x128xf32>
    %16 = tpu.matmul %14, %15, %cst_14 {dimension_numbers = #tpu.dot_dimension_numbers<[1], [0], [0], [1], [0, 0, 1, 1], [], []>} : vector<8x45xf32>, vector<45x128xf32>, vector<8x128xf32> -> vector<8x128xf32>
    %17 = vector.extract_strided_slice %16 {offsets = [0, 0], sizes = [8, 12], strides = [1, 1]} : vector<8x128xf32> to vector<8x12xf32>
    %c0_15 = arith.constant 0 : index
    %c0_16 = arith.constant 0 : index
    %18 = vector.load %arg7[%c0_15, %c0_16] : memref<1x12xf32, #tpu.memory_space<vmem>>, vector<1x12xf32>
    %19 = vector.broadcast %18 : vector<1x12xf32> to vector<8x12xf32>
    %20 = arith.addf %17, %19 : vector<8x12xf32>
    %c0_17 = arith.constant 0 : index
    %c0_18 = arith.constant 0 : index
    %21 = vector.load %arg8[%c0_17, %c0_18] : memref<8x12xf32, #tpu.memory_space<vmem>>, vector<8x12xf32>
    tpu.vector_store %arg8[%c0_17, %c0_18], %20 {strides = array<i32>} : memref<8x12xf32, #tpu.memory_space<vmem>>, vector<8x12xf32>,
    return
  }
  func.func @transform_0(%arg0: i32) -> (i32, i32) {
    %c0_i32 = arith.constant 0 : i32
    %c0_i32_0 = arith.constant 0 : i32
    return %arg0, %c0_i32 : i32, i32
  }
  func.func @transform_1(%arg0: i32) -> (i32, i32) {
    %c0_i32 = arith.constant 0 : i32
    %c0_i32_0 = arith.constant 0 : i32
    %c0_i32_1 = arith.constant 0 : i32
    return %c0_i32, %c0_i32_0 : i32, i32
  }
  func.func @transform_2(%arg0: i32) -> (i32, i32) {
    %c0_i32 = arith.constant 0 : i32
    %c0_i32_0 = arith.constant 0 : i32
    %c0_i32_1 = arith.constant 0 : i32
    return %c0_i32, %c0_i32_0 : i32, i32
  }
  func.func @transform_3(%arg0: i32) -> (i32, i32) {
    %c0_i32 = arith.constant 0 : i32
    %c0_i32_0 = arith.constant 0 : i32
    %c0_i32_1 = arith.constant 0 : i32
    return %c0_i32, %c0_i32_0 : i32, i32
  }
  func.func @transform_4(%arg0: i32) -> (i32, i32) {
    %c0_i32 = arith.constant 0 : i32
    %c0_i32_0 = arith.constant 0 : i32
    %c0_i32_1 = arith.constant 0 : i32
    return %c0_i32, %c0_i32_0 : i32, i32
  }
  func.func @transform_5(%arg0: i32) -> (i32, i32) {
    %c0_i32 = arith.constant 0 : i32
    %c0_i32_0 = arith.constant 0 : i32
    %c0_i32_1 = arith.constant 0 : i32
    return %c0_i32, %c0_i32_0 : i32, i32
  }
  func.func @transform_6(%arg0: i32) -> (i32, i32) {
    %c0_i32 = arith.constant 0 : i32
    %c0_i32_0 = arith.constant 0 : i32
    %c0_i32_1 = arith.constant 0 : i32
    return %c0_i32, %c0_i32_0 : i32, i32
  }
  func.func @transform_7(%arg0: i32) -> (i32, i32) {
    %c0_i32 = arith.constant 0 : i32
    %c0_i32_0 = arith.constant 0 : i32
    return %arg0, %c0_i32 : i32, i32
  }
}

</mosaic_0001>

<llo_original>
// kernel: sensornet_forward.1
$region0: #{sensornet_forward.1}
  #allocation0 [shape = 'u32[]', space=smem, size = 0x4, offset = 0x4, fixed_abs, tag = 'smem constant byte address 0x4 - core index']
  #allocation1 [shape = 'u32[72,128]{1,0:T(1,128)}', space=vmem, size = 0x9000, scoped, tag = 'internal scratch']
  %s0 = inlined_call_operand.hbm [shape: f32[8,15], index: 0, kind: input, shape index: {}]
  %s1 = inlined_call_operand.hbm [shape: f32[15,30], index: 1, kind: input, shape index: {}]
  %s2 = inlined_call_operand.vmem [shape: f32[1,30], index: 2, kind: input, shape index: {}]
  %s3 = inlined_call_operand.hbm [shape: f32[30,45], index: 3, kind: input, shape index: {}]
  %s4 = inlined_call_operand.vmem [shape: f32[1,45], index: 4, kind: input, shape index: {}]
  %s5 = inlined_call_operand.hbm [shape: f32[45,128], index: 5, kind: input, shape index: {}]
  %s6 = inlined_call_operand.vmem [shape: f32[1,12], index: 6, kind: input, shape index: {}]
  %s7 = inlined_call_operand.hbm [shape: f32[8,12], index: 7, kind: output, shape index: {}]
  %s8 = sld [smem:[#allocation0]]
  $region54: #{sensornet_forward.1} parent=0
    _
  %s10 = ssub.s32 1, %s8
  %s11 = scalar_select 0, %s10, %s8
  $region1: #{sensornet_forward.1} parent=0
    #allocation2 [shape = 'u8[4096]{0}', space=vmem, size = 0x1000, scoped, tag = 'input window, operand 0, single buffered']
    #allocation3 [shape = 's32[1]{0}', space=sflag, size = 0x4, scoped, tag = 'scoped memory for sensornet_forward.1']
    #allocation4 [shape = 's32[1]{0}', space=sflag, size = 0x4, scoped, tag = 'scoped memory for sensornet_forward.1']
    #allocation5 [shape = 'u8[8192]{0}', space=vmem, size = 0x2000, scoped, tag = 'input window, operand 1, single buffered']
    #allocation6 [shape = 's32[1]{0}', space=sflag, size = 0x4, scoped, tag = 'scoped memory for sensornet_forward.1']
    #allocation7 [shape = 'u8[16384]{0}', space=vmem, size = 0x4000, scoped, tag = 'input window, operand 3, single buffered']
    #allocation8 [shape = 'u8[24576]{0}', space=vmem, size = 0x6000, scoped, tag = 'input window, operand 5, single buffered']
    #allocation9 [shape = 's32[1]{0}', space=sflag, size = 0x4, scoped, tag = 'scoped memory for sensornet_forward.1']
    #allocation10 [shape = 'u8[4096]{0}', space=vmem, size = 0x1000, scoped, tag = 'output window, operand 0, single buffered']
    %12 = vsyncpa [#allocation3], 0
    %13 = vsyncpa [#allocation6], 0
    %14 = vsyncpa [#allocation9], 0
    %15 = vsyncpa [#allocation4], 0
    // Predicated region
    $region2: #{sensornet_forward.1} parent=1 // pred_check
      _
    $region3: #{sensornet_forward.1} parent=1 // pred_check_branch
      %17 = sbr.rel (0) target = $region5
    $region4: #{sensornet_forward.1} parent=1 // pred_region
      %19 = vsyncadd [#allocation3], 0
      %s21 = sshll.u32 %s0, 4
      %s22 = int_to_ptr.hbm [resolvable:$true] %s21
      %s23 = sshll.u32 [#allocation2], 4
      %s24 = int_to_ptr.vmem [resolvable:$true] %s23
      %26 = dma.hbm_to_vmem [thread:$0]  %s22, 128, %s24, [#allocation3]
    $region5: #{sensornet_forward.1} parent=1 // pred_fallthru
      _
    // Predicated region
    $region6: #{sensornet_forward.1} parent=1 // pred_check
      _
    $region7: #{sensornet_forward.1} parent=1 // pred_check_branch
      %28 = sbr.rel (0) target = $region9
    $region8: #{sensornet_forward.1} parent=1 // pred_region
      %30 = vsyncadd [#allocation6], 0
      %s31 = sshll.u32 %s1, 4
      %s32 = int_to_ptr.hbm [resolvable:$true] %s31
      %s33 = sshll.u32 [#allocation5], 4
      %s34 = int_to_ptr.vmem [resolvable:$true] %s33
      %39 = dma.hbm_to_vmem [thread:$0]  %s32, 256, %s34, [#allocation6], 128, 128, 8
    $region9: #{sensornet_forward.1} parent=1 // pred_fallthru
      _
    // Predicated region
    $region10: #{sensornet_forward.1} parent=1 // pred_check
      _
    $region11: #{sensornet_forward.1} parent=1 // pred_check_branch
      %41 = sbr.rel (0) target = $region13
    $region12: #{sensornet_forward.1} parent=1 // pred_region
      _
    $region13: #{sensornet_forward.1} parent=1 // pred_fallthru
      _
    // Predicated region
    $region14: #{sensornet_forward.1} parent=1 // pred_check
      _
    $region15: #{sensornet_forward.1} parent=1 // pred_check_branch
      %43 = sbr.rel (0) target = $region17
    $region16: #{sensornet_forward.1} parent=1 // pred_region
      %45 = vsyncadd [#allocation6], 0
      %s46 = sshll.u32 %s3, 4
      %s47 = int_to_ptr.hbm [resolvable:$true] %s46
      %s48 = sshll.u32 [#allocation7], 4
      %s49 = int_to_ptr.vmem [resolvable:$true] %s48
      %54 = dma.hbm_to_vmem [thread:$0]  %s47, 512, %s49, [#allocation6], 128, 128, 8
    $region17: #{sensornet_forward.1} parent=1 // pred_fallthru
      _
    // Predicated region
    $region18: #{sensornet_forward.1} parent=1 // pred_check
      _
    $region19: #{sensornet_forward.1} parent=1 // pred_check_branch
      %56 = sbr.rel (0) target = $region21
    $region20: #{sensornet_forward.1} parent=1 // pred_region
      _
    $region21: #{sensornet_forward.1} parent=1 // pred_fallthru
      _
    // Predicated region
    $region22: #{sensornet_forward.1} parent=1 // pred_check
      _
    $region23: #{sensornet_forward.1} parent=1 // pred_check_branch
      %58 = sbr.rel (0) target = $region25
    $region24: #{sensornet_forward.1} parent=1 // pred_region
      %60 = vsyncadd [#allocation9], 0
      %s61 = sshll.u32 %s5, 4
      %s62 = int_to_ptr.hbm [resolvable:$true] %s61
      %s63 = sshll.u32 [#allocation8], 4
      %s64 = int_to_ptr.vmem [resolvable:$true] %s63
      %69 = dma.hbm_to_vmem [thread:$0]  %s62, 768, %s64, [#allocation9], 128, 128, 8
    $region25: #{sensornet_forward.1} parent=1 // pred_fallthru
      _
    // Predicated region
    $region26: #{sensornet_forward.1} parent=1 // pred_check
      _
    $region27: #{sensornet_forward.1} parent=1 // pred_check_branch
      %71 = sbr.rel (0) target = $region29
    $region28: #{sensornet_forward.1} parent=1 // pred_region
      _
    $region29: #{sensornet_forward.1} parent=1 // pred_fallthru
      _
    // Predicated region
    $region30: #{sensornet_forward.1} parent=1 // pred_check
      _
    $region31: #{sensornet_forward.1} parent=1 // pred_check_branch
      %73 = sbr.rel (0) target = $region33
    $region32: #{sensornet_forward.1} parent=1 // pred_region
      %75 = dma.done [#allocation3], 128
    $region33: #{sensornet_forward.1} parent=1 // pred_fallthru
      _
    // Predicated region
    $region34: #{sensornet_forward.1} parent=1 // pred_check
      _
    $region35: #{sensornet_forward.1} parent=1 // pred_check_branch
      %77 = sbr.rel (0) target = $region37
    $region36: #{sensornet_forward.1} parent=1 // pred_region
      %79 = dma.done [#allocation6], 256
    $region37: #{sensornet_forward.1} parent=1 // pred_fallthru
      _
    // Predicated region
    $region38: #{sensornet_forward.1} parent=1 // pred_check
      _
    $region39: #{sensornet_forward.1} parent=1 // pred_check_branch
      %81 = sbr.rel (0) target = $region41
    $region40: #{sensornet_forward.1} parent=1 // pred_region
      %83 = dma.done [#allocation6], 512
    $region41: #{sensornet_forward.1} parent=1 // pred_fallthru
      _
    // Predicated region
    $region42: #{sensornet_forward.1} parent=1 // pred_check
      _
    $region43: #{sensornet_forward.1} parent=1 // pred_check_branch
      %85 = sbr.rel (0) target = $region45
    $region44: #{sensornet_forward.1} parent=1 // pred_region
      %87 = dma.done [#allocation9], 768
    $region45: #{sensornet_forward.1} parent=1 // pred_fallthru
      _
    %v88 = vld [vmem:[#allocation2] sm:$0xff]
    %v89 = vld [vmem:[#allocation5] sm:$0xff]
    %v90 = vld [vmem:[#allocation5 + $0x8] sm:$0x7f]
    %v91 = vld [vmem:[%s2] sm:$0x1]
    %v93 = vperm.slane %v91, 0
    %vm95 = vcmask 121856
    %v97 = vsel %vm95, %v88, 0
    %vm99 = vcmask 1046528
    %v101 = vsel %vm99, %v90, 0
    %103 = vmatpush.msra.mxu0 0.0
    %104 = vmatpush.msra.mxu0 0.0
    %105 = vmatpush.msra.mxu0 0.0
    %106 = vmatpush.msra.mxu0 0.0
    %107 = vmatpush.msra.mxu0 0.0
    %108 = vmatpush.msra.mxu0 0.0
    %109 = vmatpush.msra.mxu0 0.0
    %110 = vmatpush.msra.mxu0 0.0
    %111 = vmatpush.msra.mxu0 0.0
    %112 = vmatpush.msra.mxu0 0.0
    %113 = vmatpush.msra.mxu0 0.0
    %114 = vmatpush.msra.mxu0 0.0
    %115 = vmatpush.msra.mxu0 0.0
    %116 = vmatpush.msra.mxu0 0.0
    %117 = vmatpush.msra.mxu0 %v101
    %118 = vmatpush.msra.mxu0 %v89
    %119 = vmatmul.f32.gmra.mxu0 %v97
    %v120 = vpop.f32.mrf.mxu0
    %v121 = vadd.f32 %v93, %v120
    %122 = vdwg.mxu0
    %v123 = vmax.f32 %v121, 0.0
    %v124 = vld [vmem:[#allocation7] sm:$0xff]
    %v125 = vld [vmem:[#allocation7 + $0x8] sm:$0xff]
    %v126 = vld [vmem:[#allocation7 + $0x10] sm:$0xff]
    %v127 = vld [vmem:[#allocation7 + $0x18] sm:$0x3f]
    %v128 = vld [vmem:[%s4] sm:$0x1]
    %v130 = vperm.slane %v128, 0
    %vm132 = vcmask 244736
    %v134 = vsel %vm132, %v123, 0
    %vm136 = vcmask 1045504
    %v138 = vsel %vm136, %v127, 0
    %140 = vmatpush.msra.mxu0 0.0
    %141 = vmatpush.msra.mxu0 0.0
    %142 = vmatpush.msra.mxu0 0.0
    %143 = vmatpush.msra.mxu0 0.0
    %144 = vmatpush.msra.mxu0 0.0
    %145 = vmatpush.msra.mxu0 0.0
    %146 = vmatpush.msra.mxu0 0.0
    %147 = vmatpush.msra.mxu0 0.0
    %148 = vmatpush.msra.mxu0 0.0
    %149 = vmatpush.msra.mxu0 0.0
    %150 = vmatpush.msra.mxu0 0.0
    %151 = vmatpush.msra.mxu0 0.0
    %152 = vmatpush.msra.mxu0 %v138
    %153 = vmatpush.msra.mxu0 %v126
    %154 = vmatpush.msra.mxu0 %v125
    %155 = vmatpush.msra.mxu0 %v124
    %156 = vmatmul.f32.gmra.mxu0 %v134
    %v157 = vpop.f32.mrf.mxu0
    %v158 = vadd.f32 %v130, %v157
    %159 = vdwg.mxu0
    %v160 = vmax.f32 %v158, 0.0
    %v161 = vld [vmem:[#allocation8] sm:$0xff]
    %v162 = vld [vmem:[#allocation8 + $0x8] sm:$0xff]
    %v163 = vld [vmem:[#allocation8 + $0x10] sm:$0xff]
    %v164 = vld [vmem:[#allocation8 + $0x18] sm:$0xff]
    %v165 = vld [vmem:[#allocation8 + $0x20] sm:$0xff]
    %v166 = vld [vmem:[#allocation8 + $0x28] sm:$0x1f]
    %vm167 = vcmask 367616
    %v169 = vsel %vm167, %v160, 0
    %vm171 = vcmask 1044480
    %v173 = vsel %vm171, %v166, 0
    %175 = vmatpush.msra.mxu0 0.0
    %176 = vmatpush.msra.mxu0 0.0
    %177 = vmatpush.msra.mxu0 0.0
    %178 = vmatpush.msra.mxu0 0.0
    %179 = vmatpush.msra.mxu0 0.0
    %180 = vmatpush.msra.mxu0 0.0
    %181 = vmatpush.msra.mxu0 0.0
    %182 = vmatpush.msra.mxu0 0.0
    %183 = vmatpush.msra.mxu0 0.0
    %184 = vmatpush.msra.mxu0 0.0
    %185 = vmatpush.msra.mxu0 %v173
    %186 = vmatpush.msra.mxu0 %v165
    %187 = vmatpush.msra.mxu0 %v164
    %188 = vmatpush.msra.mxu0 %v163
    %189 = vmatpush.msra.mxu0 %v162
    %190 = vmatpush.msra.mxu0 %v161
    %191 = vmatmul.f32.gmra.mxu0 %v169
    %v192 = vpop.f32.mrf.mxu0
    %v193 = vadd.f32 0.0, %v192
    %194 = vdwg.mxu0
    %v195 = vld [vmem:[%s6] sm:$0x1]
    %v197 = vperm.slane %v195, 0
    %v199 = vadd.f32 %v193, %v197
    %vm200 = vcmask 97280
    %201 = vst.msk [vmem:[#allocation10] sm:$0xff] %vm200, %v199
    // Predicated region
    $region46: #{sensornet_forward.1} parent=1 // pred_check
      _
    $region47: #{sensornet_forward.1} parent=1 // pred_check_branch
      %203 = sbr.rel (0) target = $region49
    $region48: #{sensornet_forward.1} parent=1 // pred_region
      %205 = vsyncadd [#allocation4], 0
      %s207 = sshll.u32 [#allocation10], 4
      %s208 = int_to_ptr.vmem [resolvable:$true] %s207
      %s209 = sshll.u32 %s7, 4
      %s210 = int_to_ptr.hbm [resolvable:$true] %s209
      %212 = dma.vmem_to_hbm [thread:$0]  %s208, 128, %s210, [#allocation4]
    $region49: #{sensornet_forward.1} parent=1 // pred_fallthru
      _
    // Predicated region
    $region50: #{sensornet_forward.1} parent=1 // pred_check
      _
    $region51: #{sensornet_forward.1} parent=1 // pred_check_branch
      %214 = sbr.rel (0) target = $region53
    $region52: #{sensornet_forward.1} parent=1 // pred_region
      %216 = dma.done [#allocation4], 128
    $region53: #{sensornet_forward.1} parent=1 // pred_fallthru
      _
    %217 = vsyncpa [#allocation3], 1
    %218 = vsyncpa [#allocation6], 1
    %219 = vsyncpa [#allocation9], 1
    %220 = vsyncpa [#allocation4], 1

</llo_original>
